<compile_context>
chip_gen: v5e
topology: v5e:2x2
jax: 0.10.0
libtpu: 0.0.40
codegen_flags: <defaults>
</compile_context>

<pallas_src>
import functools

import jax
import jax.numpy as jnp
from jax.experimental import pallas as pl
from jax.experimental.pallas import tpu as pltpu


def _round_up(x: int, m: int) -> int:
    return (x + m - 1) // m * m


def _cdiv(a: int, b: int) -> int:
    return -(-a // b)


def _tile_cap() -> int:
    """Per-generation batch-tile cap (v5e: keep 256-512; v6e/v7x: up to 1024)."""
    try:
        kind = jax.devices()[0].device_kind.lower()
    except Exception:
        return 512
    if "v5" in kind:            # v5e: 1 vector-store slot, no bf16 VPU
        return 512
    return 1024


def _pick_batch_tile(batch: int, cap: int) -> int:
    """Biggest tile that still yields >= 2 grid steps (v7x dual-TC), 64-row buckets."""
    n_tiles = max(2, _cdiv(batch, cap))
    tb = min(cap, _round_up(_cdiv(batch, n_tiles), 64))
    return min(tb, _round_up(batch, 8))     # don't pad tiny batches up to 64 rows


def _mlp_kernel(x_ref, w1_ref, b1_ref, w2_ref, b2_ref, w3_ref, b3_ref, o_ref):
    """Fused 3-layer MLP on one batch tile: bf16 MXU inputs, f32 accum/VPU."""
    x = x_ref[...].astype(jnp.bfloat16)

    # Layer 1: single K=(L+C) matmul (inputs pre-concatenated by the wrapper).
    h1 = jnp.dot(x, w1_ref[...], preferred_element_type=jnp.float32) + b1_ref[...]
    h1 = jnp.maximum(h1, 0.0).astype(jnp.bfloat16)

    # Layer 2.
    h2 = jnp.dot(h1, w2_ref[...], preferred_element_type=jnp.float32) + b2_ref[...]
    h2 = jnp.maximum(h2, 0.0).astype(jnp.bfloat16)

    # Output head: logical latent_dim columns only (no 128-lane padding), so the
    # HBM write is 4x smaller than the previous padded f32 store.
    out = jnp.dot(h2, w3_ref[...], preferred_element_type=jnp.float32) + b3_ref[...]
    o_ref[...] = out.astype(o_ref.dtype)


@functools.partial(jax.jit, static_argnames=("tb",))
def _predict_pallas(comb, w1, b1, w2, b2, w3, b3, *, tb):
    b_pad, in_dim = comb.shape               # b_pad is a multiple of tb
    out_dim = w3.shape[1]

    act_spec = lambda feat: pl.BlockSpec((tb, feat), lambda i: (i, 0))
    # Constant index_map -> weights/biases stay VMEM-resident across grid steps.
    # (Their default double buffer costs <0.5 MiB total; left as-is rather than
    #  risking pipeline_mode=pl.Buffered(1) lowering differences.)
    fixed = lambda a: pl.BlockSpec(a.shape, lambda i: (0, 0))

    return pl.pallas_call(
        _mlp_kernel,
        out_shape=jax.ShapeDtypeStruct((b_pad, out_dim), jnp.float32),
        grid=(b_pad // tb,),
        in_specs=[
            act_spec(in_dim),
            fixed(w1), fixed(b1),
            fixed(w2), fixed(b2),
            fixed(w3), fixed(b3),
        ],
        out_specs=act_spec(out_dim),
        compiler_params=pltpu.CompilerParams(
            dimension_semantics=("parallel",),   # megacore: split batch across TCs
            vmem_limit_bytes=64 << 20,           # headroom; footprint is <10 MiB
        ),
    )(comb, w1, b1, w2, b2, w3, b3)


@jax.jit
def _xla_mlp(params, x):
    """Tiny-batch bypass: plain fused XLA forward (f32 weights)."""
    (w1, b1), (w2, b2), (w3, b3) = params
    h = jax.nn.relu(x @ w1 + b1)
    h = jax.nn.relu(h @ w2 + b2)
    return h @ w3 + b3


class PredictiveModelPallas:
    """JAX/Pallas port of the PyTorch PredictiveModel (2 hidden layers)."""

    PALLAS_MIN_BATCH = 65      # batch <= 64 -> XLA bypass (kernel is pure overhead)

    def __init__(self, latent_dim: int, context_dim: int,
                 hidden_dims=(512, 256), key=None):
        assert len(hidden_dims) == 2, "fused kernel is specialized to 2 hidden layers"
        if key is None:
            key = jax.random.PRNGKey(0)
        self.latent_dim = latent_dim
        self.context_dim = context_dim
        self._tb_cap = _tile_cap()

        # Logical (unpadded, f32) parameters — deterministic nn.Linear-style init.
        dims = [latent_dim + context_dim, *hidden_dims, latent_dim]
        self.logical_params = []
        for din, dout in zip(dims[:-1], dims[1:]):
            key, wk, bk = jax.random.split(key, 3)
            bound = 1.0 / (din ** 0.5)
            w = jax.random.uniform(wk, (din, dout), jnp.float32, -bound, bound)
            b = jax.random.uniform(bk, (1, dout), jnp.float32, -bound, bound)
            self.logical_params.append((w, b))

        # Kernel parameters: hidden dims zero-padded to multiples of 128 (lane-
        # dense intermediates, full-width MXU N); the output head keeps the
        # logical latent_dim column count.  Weights stored bf16, biases f32.
        h1p = _round_up(hidden_dims[0], 128)
        h2p = _round_up(hidden_dims[1], 128)
        (w1, b1), (w2, b2), (w3, b3) = self.logical_params

        def pad2(a, rows, cols):
            out = jnp.zeros((rows, cols), jnp.float32)
            return out.at[: a.shape[0], : a.shape[1]].set(a)

        in_dim = latent_dim + context_dim
        self.kernel_params = (
            pad2(w1, in_dim, h1p).astype(jnp.bfloat16),
            pad2(b1, 1, h1p),
            pad2(w2, h1p, h2p).astype(jnp.bfloat16),
            pad2(b2, 1, h2p),
            pad2(w3, h2p, latent_dim).astype(jnp.bfloat16),
            b3,                                  # (1, latent_dim), f32
        )

    def __call__(self, latent, context):
        if latent.ndim == 1:
            latent = latent[None, :]
        if context.ndim == 1:
            context = context[None, :]
        combined = jnp.concatenate([latent, context], axis=-1)
        batch = combined.shape[0]

        if batch < self.PALLAS_MIN_BATCH:
            return _xla_mlp(self.logical_params, combined)

        tb = _pick_batch_tile(batch, self._tb_cap)
        b_pad = _round_up(batch, tb)
        if b_pad != batch:
            combined = jnp.pad(combined, ((0, b_pad - batch), (0, 0)))
        out = _predict_pallas(combined, *self.kernel_params, tb=tb)
        return out[:batch]     # drop padded rows only; columns are already logical


def _reference(model: PredictiveModelPallas, latent, context,
               matmul_dtype=jnp.bfloat16):
    """Pure-JAX reference with matching matmul-input precision."""
    if latent.ndim == 1:
        latent = latent[None, :]
    if context.ndim == 1:
        context = context[None, :]
    x = jnp.concatenate([latent, context], axis=-1)
    (w1, b1), (w2, b2), (w3, b3) = model.logical_params

    def lin(v, w, b):
        return jnp.dot(v.astype(matmul_dtype), w.astype(matmul_dtype),
                       preferred_element_type=jnp.float32) + b

    h = jnp.maximum(lin(x, w1, b1), 0.0)
    h = jnp.maximum(lin(h, w2, b2), 0.0)
    return lin(h, w3, b3)


if __name__ == "__main__":
    key = jax.random.PRNGKey(0)
    k_lat, k_ctx, k_lat2, k_ctx2, k_params = jax.random.split(key, 5)

    latent_dim = 32
    context_dim = 32
    hidden_dims = (512, 256)   # module defaults

    model = PredictiveModelPallas(latent_dim, context_dim, hidden_dims, key=k_params)

    # --- Pallas path: batch above the bypass threshold, grid has >= 2 steps. ---
    batch = 128
    latent = jax.random.normal(k_lat, (batch, latent_dim), jnp.float32)
    context = jax.random.normal(k_ctx, (batch, context_dim), jnp.float32)

    out = jax.block_until_ready(model(latent, context))
    ref = _reference(model, latent, context, jnp.bfloat16)
    assert out.shape == (batch, latent_dim), out.shape
    assert jnp.allclose(out, ref, atol=2e-3, rtol=2e-3), "Pallas path mismatch"

    # --- Tiny-batch bypass path (plain fused XLA, f32 weights). ---
    small = 4
    lat_s = jax.random.normal(k_lat2, (small, latent_dim), jnp.float32)
    ctx_s = jax.random.normal(k_ctx2, (small, context_dim), jnp.float32)
    out_s = jax.block_until_ready(model(lat_s, ctx_s))
    ref_s = _reference(model, lat_s, ctx_s, jnp.float32)
    assert out_s.shape == (small, latent_dim), out_s.shape
    assert jnp.allclose(out_s, ref_s, atol=2e-3, rtol=2e-3), "bypass path mismatch"

    # --- 1-D input path (unsqueeze semantics). ---
    out1 = jax.block_until_ready(model(lat_s[0], ctx_s[0]))
    assert out1.shape == (1, latent_dim)
    assert jnp.allclose(out1, ref_s[0:1], atol=2e-3, rtol=2e-3)

    print("KERNEL_OK")
</pallas_src>

<mosaic_0001>
module attributes {stable_mosaic.version = 11 : i64} {
  func.func @_mlp_kernel(%arg0: i32, %arg1: memref<64x64xf32, #tpu.memory_space<vmem>>, %arg2: memref<64x512xbf16, #tpu.memory_space<vmem>>, %arg3: memref<1x512xf32, #tpu.memory_space<vmem>>, %arg4: memref<512x256xbf16, #tpu.memory_space<vmem>>, %arg5: memref<1x256xf32, #tpu.memory_space<vmem>>, %arg6: memref<256x32xbf16, #tpu.memory_space<vmem>>, %arg7: memref<1x32xf32, #tpu.memory_space<vmem>>, %arg8: memref<64x32xf32, #tpu.memory_space<vmem>>) attributes {dimension_semantics = [#tpu.dimension_semantics<parallel>], iteration_bounds = array<i64: 2>, scalar_prefetch = 0 : i64, scratch_operands = 0 : i64, tpu.core_type = #tpu.core_type<tc>, window_params = [{transform_indices = @transform_0, window_bounds = array<i64: 64, 64>}, {pipeline_mode = #tpu.pipeline_mode<synchronous>, transform_indices = @transform_1, window_bounds = array<i64: 64, 512>}, {pipeline_mode = #tpu.pipeline_mode<synchronous>, transform_indices = @transform_2, window_bounds = array<i64: 1, 512>}, {pipeline_mode = #tpu.pipeline_mode<synchronous>, transform_indices = @transform_3, window_bounds = array<i64: 512, 256>}, {pipeline_mode = #tpu.pipeline_mode<synchronous>, transform_indices = @transform_4, window_bounds = array<i64: 1, 256>}, {pipeline_mode = #tpu.pipeline_mode<synchronous>, transform_indices = @transform_5, window_bounds = array<i64: 256, 32>}, {pipeline_mode = #tpu.pipeline_mode<synchronous>, transform_indices = @transform_6, window_bounds = array<i64: 1, 32>}, {transform_indices = @transform_7, window_bounds = array<i64: 64, 32>}]} {
    %c0 = arith.constant 0 : index
    %c0_0 = arith.constant 0 : index
    %0 = vector.load %arg1[%c0, %c0_0] : memref<64x64xf32, #tpu.memory_space<vmem>>, vector<64x64xf32>
    %1 = arith.truncf %0 : vector<64x64xf32> to vector<64x64xbf16>
    %c0_1 = arith.constant 0 : index
    %c0_2 = arith.constant 0 : index
    %2 = vector.load %arg2[%c0_1, %c0_2] : memref<64x512xbf16, #tpu.memory_space<vmem>>, vector<64x512xbf16>
    %cst = arith.constant dense<0.000000e+00> : vector<64x512xf32>
    %3 = tpu.matmul %1, %2, %cst {dimension_numbers = #tpu.dot_dimension_numbers<[1], [0], [0], [1], [0, 0, 1, 1], [], []>} : vector<64x64xbf16>, vector<64x512xbf16>, vector<64x512xf32> -> vector<64x512xf32>
    %c0_3 = arith.constant 0 : index
    %c0_4 = arith.constant 0 : index
    %4 = vector.load %arg3[%c0_3, %c0_4] : memref<1x512xf32, #tpu.memory_space<vmem>>, vector<1x512xf32>
    %5 = vector.broadcast %4 : vector<1x512xf32> to vector<64x512xf32>
    %6 = arith.addf %3, %5 : vector<64x512xf32>
    %cst_5 = arith.constant 0.000000e+00 : f32
    %7 = vector.broadcast %cst_5 : f32 to vector<64x512xf32>
    %8 = arith.maximumf %6, %7 : vector<64x512xf32>
    %9 = arith.truncf %8 : vector<64x512xf32> to vector<64x512xbf16>
    %c0_6 = arith.constant 0 : index
    %c0_7 = arith.constant 0 : index
    %10 = vector.load %arg4[%c0_6, %c0_7] : memref<512x256xbf16, #tpu.memory_space<vmem>>, vector<512x256xbf16>
    %cst_8 = arith.constant dense<0.000000e+00> : vector<64x256xf32>
    %11 = tpu.matmul %9, %10, %cst_8 {dimension_numbers = #tpu.dot_dimension_numbers<[1], [0], [0], [1], [0, 0, 1, 1], [], []>} : vector<64x512xbf16>, vector<512x256xbf16>, vector<64x256xf32> -> vector<64x256xf32>
    %c0_9 = arith.constant 0 : index
    %c0_10 = arith.constant 0 : index
    %12 = vector.load %arg5[%c0_9, %c0_10] : memref<1x256xf32, #tpu.memory_space<vmem>>, vector<1x256xf32>
    %13 = vector.broadcast %12 : vector<1x256xf32> to vector<64x256xf32>
    %14 = arith.addf %11, %13 : vector<64x256xf32>
    %cst_11 = arith.constant 0.000000e+00 : f32
    %15 = vector.broadcast %cst_11 : f32 to vector<64x256xf32>
    %16 = arith.maximumf %14, %15 : vector<64x256xf32>
    %17 = arith.truncf %16 : vector<64x256xf32> to vector<64x256xbf16>
    %c0_12 = arith.constant 0 : index
    %c0_13 = arith.constant 0 : index
    %18 = vector.load %arg6[%c0_12, %c0_13] : memref<256x32xbf16, #tpu.memory_space<vmem>>, vector<256x32xbf16>
    %cst_14 = arith.constant dense<0.000000e+00> : vector<64x32xf32>
    %19 = tpu.matmul %17, %18, %cst_14 {dimension_numbers = #tpu.dot_dimension_numbers<[1], [0], [0], [1], [0, 0, 1, 1], [], []>} : vector<64x256xbf16>, vector<256x32xbf16>, vector<64x32xf32> -> vector<64x32xf32>
    %c0_15 = arith.constant 0 : index
    %c0_16 = arith.constant 0 : index
    %20 = vector.load %arg7[%c0_15, %c0_16] : memref<1x32xf32, #tpu.memory_space<vmem>>, vector<1x32xf32>
    %21 = vector.broadcast %20 : vector<1x32xf32> to vector<64x32xf32>
    %22 = arith.addf %19, %21 : vector<64x32xf32>
    %c0_17 = arith.constant 0 : index
    %c0_18 = arith.constant 0 : index
    %23 = vector.load %arg8[%c0_17, %c0_18] : memref<64x32xf32, #tpu.memory_space<vmem>>, vector<64x32xf32>
    tpu.vector_store %arg8[%c0_17, %c0_18], %22 {strides = array<i32>} : memref<64x32xf32, #tpu.memory_space<vmem>>, vector<64x32xf32>,
    return
  }
  func.func @transform_0(%arg0: i32) -> (i32, i32) {
    %c0_i32 = arith.constant 0 : i32
    %c0_i32_0 = arith.constant 0 : i32
    return %arg0, %c0_i32 : i32, i32
  }
  func.func @transform_1(%arg0: i32) -> (i32, i32) {
    %c0_i32 = arith.constant 0 : i32
    %c0_i32_0 = arith.constant 0 : i32
    %c0_i32_1 = arith.constant 0 : i32
    return %c0_i32, %c0_i32_0 : i32, i32
  }
  func.func @transform_2(%arg0: i32) -> (i32, i32) {
    %c0_i32 = arith.constant 0 : i32
    %c0_i32_0 = arith.constant 0 : i32
    %c0_i32_1 = arith.constant 0 : i32
    return %c0_i32, %c0_i32_0 : i32, i32
  }
  func.func @transform_3(%arg0: i32) -> (i32, i32) {
    %c0_i32 = arith.constant 0 : i32
    %c0_i32_0 = arith.constant 0 : i32
    %c0_i32_1 = arith.constant 0 : i32
    return %c0_i32, %c0_i32_0 : i32, i32
  }
  func.func @transform_4(%arg0: i32) -> (i32, i32) {
    %c0_i32 = arith.constant 0 : i32
    %c0_i32_0 = arith.constant 0 : i32
    %c0_i32_1 = arith.constant 0 : i32
    return %c0_i32, %c0_i32_0 : i32, i32
  }
  func.func @transform_5(%arg0: i32) -> (i32, i32) {
    %c0_i32 = arith.constant 0 : i32
    %c0_i32_0 = arith.constant 0 : i32
    %c0_i32_1 = arith.constant 0 : i32
    return %c0_i32, %c0_i32_0 : i32, i32
  }
  func.func @transform_6(%arg0: i32) -> (i32, i32) {
    %c0_i32 = arith.constant 0 : i32
    %c0_i32_0 = arith.constant 0 : i32
    %c0_i32_1 = arith.constant 0 : i32
    return %c0_i32, %c0_i32_0 : i32, i32
  }
  func.func @transform_7(%arg0: i32) -> (i32, i32) {
    %c0_i32 = arith.constant 0 : i32
    %c0_i32_0 = arith.constant 0 : i32
    return %arg0, %c0_i32 : i32, i32
  }
}

</mosaic_0001>

<llo_original>
// kernel: _predict_pallas.1
$region0: #{_predict_pallas.1}
  #allocation0 [shape = 'u32[]', space=smem, size = 0x4, offset = 0x4, fixed_abs, tag = 'smem constant byte address 0x4 - core index']
  #allocation1 [shape = 'u32[72,128]{1,0:T(1,128)}', space=vmem, size = 0x9000, scoped, tag = 'internal scratch']
  %s0 = inlined_call_operand.vmem [shape: f32[128,64], index: 0, kind: input, shape index: {}]
  %s1 = inlined_call_operand.vmem [shape: bf16[64,512], index: 1, kind: input, shape index: {}]
  %s2 = inlined_call_operand.vmem [shape: f32[1,512], index: 2, kind: input, shape index: {}]
  %s3 = inlined_call_operand.hbm [shape: bf16[512,256], index: 3, kind: input, shape index: {}]
  %s4 = inlined_call_operand.vmem [shape: f32[1,256], index: 4, kind: input, shape index: {}]
  %s5 = inlined_call_operand.vmem [shape: bf16[256,32], index: 5, kind: input, shape index: {}]
  %s6 = inlined_call_operand.vmem [shape: f32[1,32], index: 6, kind: input, shape index: {}]
  %s7 = inlined_call_operand.vmem [shape: f32[128,32], index: 7, kind: output, shape index: {}]
  %s8 = sld [smem:[#allocation0]]
  $region65: #{_predict_pallas.1} parent=0
    _
  %s10 = ssub.s32 1, %s8
  %s11 = scalar_select 0, %s10, %s8
  $region1: #{_predict_pallas.1} parent=0
    #allocation2 [shape = 'u8[262144]{0}', space=vmem, size = 0x40000, scoped, tag = 'input window, operand 3, single buffered']
    #allocation3 [shape = 's32[2]{0}', space=sflag, size = 0x8, scoped, tag = 'scoped memory for _predict_pallas.1']
    %12 = vsyncpa [#allocation3], 0
    loop: start=0, step=1, limit=4
    $region2: #{_predict_pallas.1} parent=1 // loop_pre_header
      _
    $region3: #{_predict_pallas.1} parent=1 // loop_header
      %s14 = sphi 0, %s18
      %p15 = scmp.ge.s32.totalorder %s14, 4
      %s24 = sphi 0, %s26
      %s27 = sphi 0, %s24
      %s28 = sphi 0, %s27
      %s44 = sphi 0, %s28
      %s48 = sphi 0, %s48
      %s50 = sphi 0, %s48
      %s51 = sphi 0, %s50
      %s65 = sphi 0, %s51
      %s69 = sphi 0, %s69
      %s71 = sphi 0, %s69
      %s72 = sphi 0, %s71
      %s86 = sphi 0, %s72
      %s90 = sphi 0, %s90
      %s92 = sphi 0, %s90
      %s93 = sphi 0, %s92
      %s107 = sphi 0, %s93
      %s111 = sphi 0, %s111
      %s113 = sphi 0, %s111
      %s114 = sphi 0, %s113
      %s128 = sphi 0, %s114
      %s132 = sphi 0, %s132
      %s134 = sphi 0, %s132
      %s135 = sphi 0, %s134
      %s149 = sphi 0, %s135
      %s153 = sphi 0, %s153
      %s155 = sphi 0, %s153
      %s156 = sphi 0, %s155
      %s170 = sphi 0, %s156
      %s176 = sphi 0, %s178
      %s179 = sphi 0, %s176
      %s180 = sphi 0, %s179
      %s196 = sphi 0, %s180
    $region4: #{_predict_pallas.1} parent=1 // loop_header_branch
      %17 = sbr.rel (%p15) target = $region8
    $region5: #{_predict_pallas.1} parent=1 // loop_body
      %s19 = ssub.s32 %s14, 1
      %s20 = ssub.s32 %s14, 2
      %s21 = sadd.s32 %s14, 1
      %s22 = ssub.s32 %s14, %s21
      %p23 = scmp.eq.s32.totalorder %s22, 0
      %s25 = sadd.s32 %s24, 1
      %s26 = scalar_select %p23, %s24, %s25
      %p29 = pneg %p23
      %p30 = scmp.eq.s32.totalorder %s14, 1
      %p31 = por %p29, %p30
      %p32 = scmp.ne.s32.totalorder %s24, %s27
      %p33 = scmp.eq.s32.totalorder %s14, 0
      %p34 = por %p32, %p33
      %p35 = scmp.ne.s32.totalorder %s24, %s27
      %p36 = scmp.eq.s32.totalorder %s19, 1
      %p37 = por %p35, %p36
      %p38 = scmp.ne.s32.totalorder %s27, %s28
      %p39 = scmp.eq.s32.totalorder %s19, 0
      %p40 = por %p38, %p39
      %p41 = scmp.ne.s32.totalorder %s27, %s28
      %p42 = scmp.eq.s32.totalorder %s20, 1
      %p43 = por %p41, %p42
      %p45 = scmp.ne.s32.totalorder %s28, %s44
      %p46 = scmp.eq.s32.totalorder %s20, 0
      %p47 = por %p45, %p46
      %s49 = sadd.s32 %s48, 1
      %p52 = scmp.eq.s32.totalorder %s14, 1
      %p53 = scmp.ne.s32.totalorder %s48, %s50
      %p54 = scmp.eq.s32.totalorder %s14, 0
      %p55 = por %p53, %p54
      %p56 = scmp.ne.s32.totalorder %s48, %s50
      %p57 = scmp.eq.s32.totalorder %s19, 1
      %p58 = por %p56, %p57
      %p59 = scmp.ne.s32.totalorder %s50, %s51
      %p60 = scmp.eq.s32.totalorder %s19, 0
      %p61 = por %p59, %p60
      %p62 = scmp.ne.s32.totalorder %s50, %s51
      %p63 = scmp.eq.s32.totalorder %s20, 1
      %p64 = por %p62, %p63
      %p66 = scmp.ne.s32.totalorder %s51, %s65
      %p67 = scmp.eq.s32.totalorder %s20, 0
      %p68 = por %p66, %p67
      %s70 = sadd.s32 %s69, 1
      %p73 = scmp.eq.s32.totalorder %s14, 1
      %p74 = scmp.ne.s32.totalorder %s69, %s71
      %p75 = scmp.eq.s32.totalorder %s14, 0
      %p76 = por %p74, %p75
      %p77 = scmp.ne.s32.totalorder %s69, %s71
      %p78 = scmp.eq.s32.totalorder %s19, 1
      %p79 = por %p77, %p78
      %p80 = scmp.ne.s32.totalorder %s71, %s72
      %p81 = scmp.eq.s32.totalorder %s19, 0
      %p82 = por %p80, %p81
      %p83 = scmp.ne.s32.totalorder %s71, %s72
      %p84 = scmp.eq.s32.totalorder %s20, 1
      %p85 = por %p83, %p84
      %p87 = scmp.ne.s32.totalorder %s72, %s86
      %p88 = scmp.eq.s32.totalorder %s20, 0
      %p89 = por %p87, %p88
      %s91 = sadd.s32 %s90, 1
      %p94 = scmp.eq.s32.totalorder %s14, 1
      %p95 = scmp.ne.s32.totalorder %s90, %s92
      %p96 = scmp.eq.s32.totalorder %s14, 0
      %p97 = por %p95, %p96
      %p98 = scmp.ne.s32.totalorder %s90, %s92
      %p99 = scmp.eq.s32.totalorder %s19, 1
      %p100 = por %p98, %p99
      %p101 = scmp.ne.s32.totalorder %s92, %s93
      %p102 = scmp.eq.s32.totalorder %s19, 0
      %p103 = por %p101, %p102
      %p104 = scmp.ne.s32.totalorder %s92, %s93
      %p105 = scmp.eq.s32.totalorder %s20, 1
      %p106 = por %p104, %p105
      %p108 = scmp.ne.s32.totalorder %s93, %s107
      %p109 = scmp.eq.s32.totalorder %s20, 0
      %p110 = por %p108, %p109
      %s112 = sadd.s32 %s111, 1
      %p115 = scmp.eq.s32.totalorder %s14, 1
      %p116 = scmp.ne.s32.totalorder %s111, %s113
      %p117 = scmp.eq.s32.totalorder %s14, 0
      %p118 = por %p116, %p117
      %p119 = scmp.ne.s32.totalorder %s111, %s113
      %p120 = scmp.eq.s32.totalorder %s19, 1
      %p121 = por %p119, %p120
      %p122 = scmp.ne.s32.totalorder %s113, %s114
      %p123 = scmp.eq.s32.totalorder %s19, 0
      %p124 = por %p122, %p123
      %p125 = scmp.ne.s32.totalorder %s113, %s114
      %p126 = scmp.eq.s32.totalorder %s20, 1
      %p127 = por %p125, %p126
      %p129 = scmp.ne.s32.totalorder %s114, %s128
      %p130 = scmp.eq.s32.totalorder %s20, 0
      %p131 = por %p129, %p130
      %s133 = sadd.s32 %s132, 1
      %p136 = scmp.eq.s32.totalorder %s14, 1
      %p137 = scmp.ne.s32.totalorder %s132, %s134
      %p138 = scmp.eq.s32.totalorder %s14, 0
      %p139 = por %p137, %p138
      %p140 = scmp.ne.s32.totalorder %s132, %s134
      %p141 = scmp.eq.s32.totalorder %s19, 1
      %p142 = por %p140, %p141
      %p143 = scmp.ne.s32.totalorder %s134, %s135
      %p144 = scmp.eq.s32.totalorder %s19, 0
      %p145 = por %p143, %p144
      %p146 = scmp.ne.s32.totalorder %s134, %s135
      %p147 = scmp.eq.s32.totalorder %s20, 1
      %p148 = por %p146, %p147
      %p150 = scmp.ne.s32.totalorder %s135, %s149
      %p151 = scmp.eq.s32.totalorder %s20, 0
      %p152 = por %p150, %p151
      %s154 = sadd.s32 %s153, 1
      %p157 = scmp.eq.s32.totalorder %s14, 1
      %p158 = scmp.ne.s32.totalorder %s153, %s155
      %p159 = scmp.eq.s32.totalorder %s14, 0
      %p160 = por %p158, %p159
      %p161 = scmp.ne.s32.totalorder %s153, %s155
      %p162 = scmp.eq.s32.totalorder %s19, 1
      %p163 = por %p161, %p162
      %p164 = scmp.ne.s32.totalorder %s155, %s156
      %p165 = scmp.eq.s32.totalorder %s19, 0
      %p166 = por %p164, %p165
      %p167 = scmp.ne.s32.totalorder %s155, %s156
      %p168 = scmp.eq.s32.totalorder %s20, 1
      %p169 = por %p167, %p168
      %p171 = scmp.ne.s32.totalorder %s156, %s170
      %p172 = scmp.eq.s32.totalorder %s20, 0
      %p173 = por %p171, %p172
      %s174 = ssub.s32 %s14, %s21
      %p175 = scmp.eq.s32.totalorder %s174, 0
      %s177 = sadd.s32 %s176, 1
      %s178 = scalar_select %p175, %s176, %s177
      %p181 = pneg %p175
      %p182 = scmp.eq.s32.totalorder %s14, 1
      %p183 = por %p181, %p182
      %p184 = scmp.ne.s32.totalorder %s176, %s179
      %p185 = scmp.eq.s32.totalorder %s14, 0
      %p186 = por %p184, %p185
      %p187 = scmp.ne.s32.totalorder %s176, %s179
      %p188 = scmp.eq.s32.totalorder %s19, 1
      %p189 = por %p187, %p188
      %p190 = scmp.ne.s32.totalorder %s179, %s180
      %p191 = scmp.eq.s32.totalorder %s19, 0
      %p192 = por %p190, %p191
      %p193 = scmp.ne.s32.totalorder %s179, %s180
      %p194 = scmp.eq.s32.totalorder %s20, 1
      %p195 = por %p193, %p194
      %p197 = scmp.ne.s32.totalorder %s180, %s196
      %p198 = scmp.eq.s32.totalorder %s20, 0
      %p199 = por %p197, %p198
      %p200 = scmp.le.s32.totalorder 1, %s14
      %p201 = scmp.lt.s32.totalorder %s14, 3
      %p202 = pnand %p200, %p201
      %p203 = pneg %p202
      // Predicated region
      $region9: #{_predict_pallas.1} parent=5 // pred_check
        _
      $region10: #{_predict_pallas.1} parent=5 // pred_check_branch
        %205 = sbr.rel (%p202) target = $region12
      $region11: #{_predict_pallas.1} parent=5 // pred_region
        %s206 = ssub.s32 %s14, 1
        // Predicated region
        $region13: #{_predict_pallas.1} parent=11 // pred_check
          %p207 = pneg %p61
        $region14: #{_predict_pallas.1} parent=11 // pred_check_branch
          %209 = sbr.rel (%p207) target = $region16
        $region15: #{_predict_pallas.1} parent=11 // pred_region
          _
        $region16: #{_predict_pallas.1} parent=11 // pred_fallthru
          _
        // Predicated region
        $region17: #{_predict_pallas.1} parent=11 // pred_check
          %p210 = pneg %p82
        $region18: #{_predict_pallas.1} parent=11 // pred_check_branch
          %212 = sbr.rel (%p210) target = $region20
        $region19: #{_predict_pallas.1} parent=11 // pred_region
          _
        $region20: #{_predict_pallas.1} parent=11 // pred_fallthru
          _
        // Predicated region
        $region21: #{_predict_pallas.1} parent=11 // pred_check
          %p213 = pneg %p103
        $region22: #{_predict_pallas.1} parent=11 // pred_check_branch
          %215 = sbr.rel (%p213) target = $region24
        $region23: #{_predict_pallas.1} parent=11 // pred_region
          %217 = vsyncadd [#allocation3], 0
          %s218 = sshll.u32 %s3, 4
          %s219 = int_to_ptr.hbm [resolvable:$true] %s218
          %s220 = sshll.u32 [#allocation2], 4
          %s221 = int_to_ptr.vmem [resolvable:$true] %s220
          %226 = dma.hbm_to_vmem [thread:$0]  %s219, 8192, %s221, [#allocation3], 128, 128, 8
        $region24: #{_predict_pallas.1} parent=11 // pred_fallthru
          _
        // Predicated region
        $region25: #{_predict_pallas.1} parent=11 // pred_check
          %p227 = pneg %p124
        $region26: #{_predict_pallas.1} parent=11 // pred_check_branch
          %229 = sbr.rel (%p227) target = $region28
        $region27: #{_predict_pallas.1} parent=11 // pred_region
          _
        $region28: #{_predict_pallas.1} parent=11 // pred_fallthru
          _
        // Predicated region
        $region29: #{_predict_pallas.1} parent=11 // pred_check
          %p230 = pneg %p145
        $region30: #{_predict_pallas.1} parent=11 // pred_check_branch
          %232 = sbr.rel (%p230) target = $region32
        $region31: #{_predict_pallas.1} parent=11 // pred_region
          _
        $region32: #{_predict_pallas.1} parent=11 // pred_fallthru
          _
        // Predicated region
        $region33: #{_predict_pallas.1} parent=11 // pred_check
          %p233 = pneg %p166
        $region34: #{_predict_pallas.1} parent=11 // pred_check_branch
          %235 = sbr.rel (%p233) target = $region36
        $region35: #{_predict_pallas.1} parent=11 // pred_region
          _
        $region36: #{_predict_pallas.1} parent=11 // pred_fallthru
          _
      $region12: #{_predict_pallas.1} parent=5 // pred_fallthru
        _
      %p236 = scmp.lt.s32.totalorder %s14, 2
      // Predicated region
      $region37: #{_predict_pallas.1} parent=5 // pred_check
        %p237 = pneg %p236
      $region38: #{_predict_pallas.1} parent=5 // pred_check_branch
        %239 = sbr.rel (%p237) target = $region40
      $region39: #{_predict_pallas.1} parent=5 // pred_region
        // Predicated region
        $region41: #{_predict_pallas.1} parent=39 // pred_check
          %p240 = pneg %p34
        $region42: #{_predict_pallas.1} parent=39 // pred_check_branch
          %242 = sbr.rel (%p240) target = $region44
        $region43: #{_predict_pallas.1} parent=39 // pred_region
          %s243 = smul.u32 8, %s14
          %p244 = scmp.lt.s32.totalorder %s243, 15
          %s245 = scalar_select %p244, %s243, 15
          %s246 = smul.addr %s245, 8
          %s247 = scalar_lea.vmem %s0, %s246
          %s248 = smul.u32 8, %s14
        $region44: #{_predict_pallas.1} parent=39 // pred_fallthru
          _
      $region40: #{_predict_pallas.1} parent=5 // pred_fallthru
        _
      %p249 = scmp.le.s32.totalorder 1, %s14
      %p250 = scmp.lt.s32.totalorder %s14, 3
      %p251 = pnand %p249, %p250
      %p252 = pneg %p251
      // Predicated region
      $region45: #{_predict_pallas.1} parent=5 // pred_check
        _
      $region46: #{_predict_pallas.1} parent=5 // pred_check_branch
        %254 = sbr.rel (%p251) target = $region48
      $region47: #{_predict_pallas.1} parent=5 // pred_region
        %s255 = ssub.s32 %s14, 1
        // Predicated region
        $region49: #{_predict_pallas.1} parent=47 // pred_check
          %p256 = pneg %p103
        $region50: #{_predict_pallas.1} parent=47 // pred_check_branch
          %258 = sbr.rel (%p256) target = $region52
        $region51: #{_predict_pallas.1} parent=47 // pred_region
          %260 = dma.done [#allocation3], 8192
        $region52: #{_predict_pallas.1} parent=47 // pred_fallthru
          _
        %s261 = smul.u32 8, %s19
        %p262 = scmp.lt.s32.totalorder %s261, 15
        %s263 = scalar_select %p262, %s261, 15
        %s264 = smul.addr %s263, 8
        %s265 = scalar_lea.vmem %s0, %s264
        %p266 = pneg %p40
        %p267 = pneg %p37
        %p268 = pneg %p61
        %p269 = pneg %p58
        %p270 = pneg %p82
        %p271 = pneg %p79
        %p272 = pneg %p103
        %p273 = pneg %p100
        %p274 = pneg %p124
        %p275 = pneg %p121
        %p276 = pneg %p145
        %p277 = pneg %p142
        %p278 = pneg %p166
        %p279 = pneg %p163
        %p280 = pneg %p192
        %p281 = pneg %p189
        %s282 = smul.u32 8, %s19
        %p283 = scmp.lt.s32.totalorder %s282, 15
        %s284 = scalar_select %p283, %s282, 15
        %s285 = smul.addr %s284, 8
        %s286 = scalar_lea.vmem %s7, %s285
        %s287 = smul.u32 8, %s19
        %p288 = scmp.lt.s32.totalorder %s287, 15
        %s289 = scalar_select %p288, %s287, 15
        %s290 = smul.addr %s289, 8
        %s291 = scalar_lea.vmem %s0, %s290
        %s292 = smul.u32 8, %s19
        %s293 = smul.u32 8, %s19
        %p294 = scmp.lt.s32.totalorder %s293, 15
        %s295 = scalar_select %p294, %s293, 15
        %s296 = smul.addr %s295, 8
        %s297 = scalar_lea.vmem %s7, %s296
        %s298 = smul.u32 8, %s19
        %v300 = vld [vmem:[%s291] sm:$0xff]
        %v301 = vld [vmem:[%s291 + $0x8] sm:$0xff]
        %v302 = vld [vmem:[%s291 + $0x10] sm:$0xff]
        %v303 = vld [vmem:[%s291 + $0x18] sm:$0xff]
        %v304 = vld [vmem:[%s291 + $0x20] sm:$0xff]
        %v305 = vld [vmem:[%s291 + $0x28] sm:$0xff]
        %v306 = vld [vmem:[%s291 + $0x30] sm:$0xff]
        %v307 = vld [vmem:[%s291 + $0x38] sm:$0xff]
        %v308 = vpack.c.bf16 %v301, %v300
        %v309 = vpack.c.bf16 %v303, %v302
        %v310 = vpack.c.bf16 %v305, %v304
        %v311 = vpack.c.bf16 %v307, %v306
        %v312 = vld [vmem:[%s1] sm:$0xff]
        %v313 = vld [vmem:[%s1 + $0x8] sm:$0xff]
        %v314 = vld [vmem:[%s1 + $0x10] sm:$0xff]
        %v315 = vld [vmem:[%s1 + $0x18] sm:$0xff]
        %v316 = vld [vmem:[%s1 + $0x20] sm:$0xff]
        %v317 = vld [vmem:[%s1 + $0x28] sm:$0xff]
        %v318 = vld [vmem:[%s1 + $0x30] sm:$0xff]
        %v319 = vld [vmem:[%s1 + $0x38] sm:$0xff]
        %v320 = vld [vmem:[%s1 + $0x40] sm:$0xff]
        %v321 = vld [vmem:[%s1 + $0x48] sm:$0xff]
        %v322 = vld [vmem:[%s1 + $0x50] sm:$0xff]
        %v323 = vld [vmem:[%s1 + $0x58] sm:$0xff]
        %v324 = vld [vmem:[%s1 + $0x60] sm:$0xff]
        %v325 = vld [vmem:[%s1 + $0x68] sm:$0xff]
        %v326 = vld [vmem:[%s1 + $0x70] sm:$0xff]
        %v327 = vld [vmem:[%s1 + $0x78] sm:$0xff]
        %v328 = vld [vmem:[%s2] sm:$0xf]
        %v330 = vperm.slane %v328, 0
        %v331 = vperm.slane %v328, 1
        %v332 = vperm.slane %v328, 2
        %v333 = vperm.slane %v328, 3
        %v354 = vunpack.c.l.b16 %v312
        %v355 = vunpack.c.h.b16 %v312
        %v356 = vunpack.c.l.b16 %v313
        %v357 = vunpack.c.h.b16 %v313
        %v358 = vunpack.c.l.b16 %v314
        %v359 = vunpack.c.h.b16 %v314
        %v360 = vunpack.c.l.b16 %v315
        %v361 = vunpack.c.h.b16 %v315
        %v362 = vunpack.c.l.b16 %v316
        %v363 = vunpack.c.h.b16 %v316
        %v364 = vunpack.c.l.b16 %v317
        %v365 = vunpack.c.h.b16 %v317
        %v366 = vunpack.c.l.b16 %v318
        %v367 = vunpack.c.h.b16 %v318
        %v368 = vunpack.c.l.b16 %v319
        %v369 = vunpack.c.h.b16 %v319
        %v370 = vunpack.c.l.b16 %v320
        %v371 = vunpack.c.h.b16 %v320
        %v372 = vunpack.c.l.b16 %v321
        %v373 = vunpack.c.h.b16 %v321
        %v374 = vunpack.c.l.b16 %v322
        %v375 = vunpack.c.h.b16 %v322
        %v376 = vunpack.c.l.b16 %v323
        %v377 = vunpack.c.h.b16 %v323
        %v378 = vunpack.c.l.b16 %v324
        %v379 = vunpack.c.h.b16 %v324
        %v380 = vunpack.c.l.b16 %v325
        %v381 = vunpack.c.h.b16 %v325
        %v382 = vunpack.c.l.b16 %v326
        %v383 = vunpack.c.h.b16 %v326
        %v384 = vunpack.c.l.b16 %v327
        %v385 = vunpack.c.h.b16 %v327
        %v386 = vpack.c.b16 %v358, %v354
        %v387 = vpack.c.b16 %v359, %v355
        %v388 = vpack.c.b16 %v360, %v356
        %v389 = vpack.c.b16 %v361, %v357
        %v390 = vpack.c.b16 %v366, %v362
        %v391 = vpack.c.b16 %v367, %v363
        %v392 = vpack.c.b16 %v368, %v364
        %v393 = vpack.c.b16 %v369, %v365
        %v394 = vpack.c.b16 %v374, %v370
        %v395 = vpack.c.b16 %v375, %v371
        %v396 = vpack.c.b16 %v376, %v372
        %v397 = vpack.c.b16 %v377, %v373
        %v398 = vpack.c.b16 %v382, %v378
        %v399 = vpack.c.b16 %v383, %v379
        %v400 = vpack.c.b16 %v384, %v380
        %v401 = vpack.c.b16 %v385, %v381
        %vm418 = vcmask 523264
        %v420 = vsel %vm418, %v308, 0
        %v423 = vsel %vm418, %v309, 0
        %v426 = vsel %vm418, %v310, 0
        %v429 = vsel %vm418, %v311, 0
        %431 = vmatpush.bf16.msra.mxu0 0
        %432 = vmatpush.bf16.msra.mxu0 0
        %433 = vmatpush.bf16.msra.mxu0 0
        %434 = vmatpush.bf16.msra.mxu0 0
        %435 = vmatpush.bf16.msra.mxu0 %v398
        %436 = vmatpush.bf16.msra.mxu0 %v394
        %437 = vmatpush.bf16.msra.mxu0 %v390
        %438 = vmatpush.bf16.msra.mxu0 %v386
        %439 = vmatmul.bf16.gmra.mxu0 %v420
        %v440 = vpop.f32.mrf.mxu0
        %v441 = vadd.f32 %v330, %v440
        %v442 = vpop.f32.mrf.mxu0
        %v443 = vadd.f32 %v330, %v442
        %444 = vmatmul.bf16.gmra.mxu0 %v423
        %v445 = vpop.f32.mrf.mxu0
        %v446 = vadd.f32 %v330, %v445
        %v447 = vpop.f32.mrf.mxu0
        %v448 = vadd.f32 %v330, %v447
        %449 = vmatmul.bf16.gmra.mxu0 %v426
        %v450 = vpop.f32.mrf.mxu0
        %v451 = vadd.f32 %v330, %v450
        %v452 = vpop.f32.mrf.mxu0
        %v453 = vadd.f32 %v330, %v452
        %454 = vmatmul.bf16.gmra.mxu0 %v429
        %v455 = vpop.f32.mrf.mxu0
        %v456 = vadd.f32 %v330, %v455
        %v457 = vpop.f32.mrf.mxu0
        %v458 = vadd.f32 %v330, %v457
        %459 = vdwg.mxu0
        %460 = vmatpush.bf16.msra.mxu0 0
        %461 = vmatpush.bf16.msra.mxu0 0
        %462 = vmatpush.bf16.msra.mxu0 0
        %463 = vmatpush.bf16.msra.mxu0 0
        %464 = vmatpush.bf16.msra.mxu0 %v399
        %465 = vmatpush.bf16.msra.mxu0 %v395
        %466 = vmatpush.bf16.msra.mxu0 %v391
        %467 = vmatpush.bf16.msra.mxu0 %v387
        %468 = vmatmul.bf16.gmra.mxu0 %v420
        %v469 = vpop.f32.mrf.mxu0
        %v470 = vadd.f32 %v331, %v469
        %v471 = vpop.f32.mrf.mxu0
        %v472 = vadd.f32 %v331, %v471
        %473 = vmatmul.bf16.gmra.mxu0 %v423
        %v474 = vpop.f32.mrf.mxu0
        %v475 = vadd.f32 %v331, %v474
        %v476 = vpop.f32.mrf.mxu0
        %v477 = vadd.f32 %v331, %v476
        %478 = vmatmul.bf16.gmra.mxu0 %v426
        %v479 = vpop.f32.mrf.mxu0
        %v480 = vadd.f32 %v331, %v479
        %v481 = vpop.f32.mrf.mxu0
        %v482 = vadd.f32 %v331, %v481
        %483 = vmatmul.bf16.gmra.mxu0 %v429
        %v484 = vpop.f32.mrf.mxu0
        %v485 = vadd.f32 %v331, %v484
        %v486 = vpop.f32.mrf.mxu0
        %v487 = vadd.f32 %v331, %v486
        %488 = vdwg.mxu0
        %489 = vmatpush.bf16.msra.mxu0 0
        %490 = vmatpush.bf16.msra.mxu0 0
        %491 = vmatpush.bf16.msra.mxu0 0
        %492 = vmatpush.bf16.msra.mxu0 0
        %493 = vmatpush.bf16.msra.mxu0 %v400
        %494 = vmatpush.bf16.msra.mxu0 %v396
        %495 = vmatpush.bf16.msra.mxu0 %v392
        %496 = vmatpush.bf16.msra.mxu0 %v388
        %497 = vmatmul.bf16.gmra.mxu0 %v420
        %v498 = vpop.f32.mrf.mxu0
        %v499 = vadd.f32 %v332, %v498
        %v500 = vpop.f32.mrf.mxu0
        %v501 = vadd.f32 %v332, %v500
        %502 = vmatmul.bf16.gmra.mxu0 %v423
        %v503 = vpop.f32.mrf.mxu0
        %v504 = vadd.f32 %v332, %v503
        %v505 = vpop.f32.mrf.mxu0
        %v506 = vadd.f32 %v332, %v505
        %507 = vmatmul.bf16.gmra.mxu0 %v426
        %v508 = vpop.f32.mrf.mxu0
        %v509 = vadd.f32 %v332, %v508
        %v510 = vpop.f32.mrf.mxu0
        %v511 = vadd.f32 %v332, %v510
        %512 = vmatmul.bf16.gmra.mxu0 %v429
        %v513 = vpop.f32.mrf.mxu0
        %v514 = vadd.f32 %v332, %v513
        %v515 = vpop.f32.mrf.mxu0
        %v516 = vadd.f32 %v332, %v515
        %517 = vdwg.mxu0
        %518 = vmatpush.bf16.msra.mxu0 0
        %519 = vmatpush.bf16.msra.mxu0 0
        %520 = vmatpush.bf16.msra.mxu0 0
        %521 = vmatpush.bf16.msra.mxu0 0
        %522 = vmatpush.bf16.msra.mxu0 %v401
        %523 = vmatpush.bf16.msra.mxu0 %v397
        %524 = vmatpush.bf16.msra.mxu0 %v393
        %525 = vmatpush.bf16.msra.mxu0 %v389
        %526 = vmatmul.bf16.gmra.mxu0 %v420
        %v527 = vpop.f32.mrf.mxu0
        %v528 = vadd.f32 %v333, %v527
        %v529 = vpop.f32.mrf.mxu0
        %v530 = vadd.f32 %v333, %v529
        %531 = vmatmul.bf16.gmra.mxu0 %v423
        %v532 = vpop.f32.mrf.mxu0
        %v533 = vadd.f32 %v333, %v532
        %v534 = vpop.f32.mrf.mxu0
        %v535 = vadd.f32 %v333, %v534
        %536 = vmatmul.bf16.gmra.mxu0 %v426
        %v537 = vpop.f32.mrf.mxu0
        %v538 = vadd.f32 %v333, %v537
        %v539 = vpop.f32.mrf.mxu0
        %v540 = vadd.f32 %v333, %v539
        %541 = vmatmul.bf16.gmra.mxu0 %v429
        %v542 = vpop.f32.mrf.mxu0
        %v543 = vadd.f32 %v333, %v542
        %v544 = vpop.f32.mrf.mxu0
        %v545 = vadd.f32 %v333, %v544
        %546 = vdwg.mxu0
        %v547 = vmax.f32 %v441, 0.0
        %v548 = vmax.f32 %v470, 0.0
        %v549 = vmax.f32 %v499, 0.0
        %v550 = vmax.f32 %v528, 0.0
        %v551 = vmax.f32 %v443, 0.0
        %v552 = vmax.f32 %v472, 0.0
        %v553 = vmax.f32 %v501, 0.0
        %v554 = vmax.f32 %v530, 0.0
        %v555 = vmax.f32 %v446, 0.0
        %v556 = vmax.f32 %v475, 0.0
        %v557 = vmax.f32 %v504, 0.0
        %v558 = vmax.f32 %v533, 0.0
        %v559 = vmax.f32 %v448, 0.0
        %v560 = vmax.f32 %v477, 0.0
        %v561 = vmax.f32 %v506, 0.0
        %v562 = vmax.f32 %v535, 0.0
        %v563 = vmax.f32 %v451, 0.0
        %v564 = vmax.f32 %v480, 0.0
        %v565 = vmax.f32 %v509, 0.0
        %v566 = vmax.f32 %v538, 0.0
        %v567 = vmax.f32 %v453, 0.0
        %v568 = vmax.f32 %v482, 0.0
        %v569 = vmax.f32 %v511, 0.0
        %v570 = vmax.f32 %v540, 0.0
        %v571 = vmax.f32 %v456, 0.0
        %v572 = vmax.f32 %v485, 0.0
        %v573 = vmax.f32 %v514, 0.0
        %v574 = vmax.f32 %v543, 0.0
        %v575 = vmax.f32 %v458, 0.0
        %v576 = vmax.f32 %v487, 0.0
        %v577 = vmax.f32 %v516, 0.0
        %v578 = vmax.f32 %v545, 0.0
        %v579 = vpack.c.bf16 %v551, %v547
        %v580 = vpack.c.bf16 %v552, %v548
        %v581 = vpack.c.bf16 %v553, %v549
        %v582 = vpack.c.bf16 %v554, %v550
        %v583 = vpack.c.bf16 %v559, %v555
        %v584 = vpack.c.bf16 %v560, %v556
        %v585 = vpack.c.bf16 %v561, %v557
        %v586 = vpack.c.bf16 %v562, %v558
        %v587 = vpack.c.bf16 %v567, %v563
        %v588 = vpack.c.bf16 %v568, %v564
        %v589 = vpack.c.bf16 %v569, %v565
        %v590 = vpack.c.bf16 %v570, %v566
        %v591 = vpack.c.bf16 %v575, %v571
        %v592 = vpack.c.bf16 %v576, %v572
        %v593 = vpack.c.bf16 %v577, %v573
        %v594 = vpack.c.bf16 %v578, %v574
        %v595 = vld [vmem:[#allocation2] sm:$0xff]
        %v596 = vld [vmem:[#allocation2 + $0x8] sm:$0xff]
        %v597 = vld [vmem:[#allocation2 + $0x10] sm:$0xff]
        %v598 = vld [vmem:[#allocation2 + $0x18] sm:$0xff]
        %v599 = vld [vmem:[#allocation2 + $0x20] sm:$0xff]
        %v600 = vld [vmem:[#allocation2 + $0x28] sm:$0xff]
        %v601 = vld [vmem:[#allocation2 + $0x30] sm:$0xff]
        %v602 = vld [vmem:[#allocation2 + $0x38] sm:$0xff]
        %v603 = vld [vmem:[#allocation2 + $0x40] sm:$0xff]
        %v604 = vld [vmem:[#allocation2 + $0x48] sm:$0xff]
        %v605 = vld [vmem:[#allocation2 + $0x50] sm:$0xff]
        %v606 = vld [vmem:[#allocation2 + $0x58] sm:$0xff]
        %v607 = vld [vmem:[#allocation2 + $0x60] sm:$0xff]
        %v608 = vld [vmem:[#allocation2 + $0x68] sm:$0xff]
        %v609 = vld [vmem:[#allocation2 + $0x70] sm:$0xff]
        %v610 = vld [vmem:[#allocation2 + $0x78] sm:$0xff]
        %v611 = vld [vmem:[#allocation2 + $0x80] sm:$0xff]
        %v612 = vld [vmem:[#allocation2 + $0x88] sm:$0xff]
        %v613 = vld [vmem:[#allocation2 + $0x90] sm:$0xff]
        %v614 = vld [vmem:[#allocation2 + $0x98] sm:$0xff]
        %v615 = vld [vmem:[#allocation2 + $0xa0] sm:$0xff]
        %v616 = vld [vmem:[#allocation2 + $0xa8] sm:$0xff]
        %v617 = vld [vmem:[#allocation2 + $0xb0] sm:$0xff]
        %v618 = vld [vmem:[#allocation2 + $0xb8] sm:$0xff]
        %v619 = vld [vmem:[#allocation2 + $0xc0] sm:$0xff]
        %v620 = vld [vmem:[#allocation2 + $0xc8] sm:$0xff]
        %v621 = vld [vmem:[#allocation2 + $0xd0] sm:$0xff]
        %v622 = vld [vmem:[#allocation2 + $0xd8] sm:$0xff]
        %v623 = vld [vmem:[#allocation2 + $0xe0] sm:$0xff]
        %v624 = vld [vmem:[#allocation2 + $0xe8] sm:$0xff]
        %v625 = vld [vmem:[#allocation2 + $0xf0] sm:$0xff]
        %v626 = vld [vmem:[#allocation2 + $0xf8] sm:$0xff]
        %v627 = vld [vmem:[#allocation2 + $0x100] sm:$0xff]
        %v628 = vld [vmem:[#allocation2 + $0x108] sm:$0xff]
        %v629 = vld [vmem:[#allocation2 + $0x110] sm:$0xff]
        %v630 = vld [vmem:[#allocation2 + $0x118] sm:$0xff]
        %v631 = vld [vmem:[#allocation2 + $0x120] sm:$0xff]
        %v632 = vld [vmem:[#allocation2 + $0x128] sm:$0xff]
        %v633 = vld [vmem:[#allocation2 + $0x130] sm:$0xff]
        %v634 = vld [vmem:[#allocation2 + $0x138] sm:$0xff]
        %v635 = vld [vmem:[#allocation2 + $0x140] sm:$0xff]
        %v636 = vld [vmem:[#allocation2 + $0x148] sm:$0xff]
        %v637 = vld [vmem:[#allocation2 + $0x150] sm:$0xff]
        %v638 = vld [vmem:[#allocation2 + $0x158] sm:$0xff]
        %v639 = vld [vmem:[#allocation2 + $0x160] sm:$0xff]
        %v640 = vld [vmem:[#allocation2 + $0x168] sm:$0xff]
        %v641 = vld [vmem:[#allocation2 + $0x170] sm:$0xff]
        %v642 = vld [vmem:[#allocation2 + $0x178] sm:$0xff]
        %v643 = vld [vmem:[#allocation2 + $0x180] sm:$0xff]
        %v644 = vld [vmem:[#allocation2 + $0x188] sm:$0xff]
        %v645 = vld [vmem:[#allocation2 + $0x190] sm:$0xff]
        %v646 = vld [vmem:[#allocation2 + $0x198] sm:$0xff]
        %v647 = vld [vmem:[#allocation2 + $0x1a0] sm:$0xff]
        %v648 = vld [vmem:[#allocation2 + $0x1a8] sm:$0xff]
        %v649 = vld [vmem:[#allocation2 + $0x1b0] sm:$0xff]
        %v650 = vld [vmem:[#allocation2 + $0x1b8] sm:$0xff]
        %v651 = vld [vmem:[#allocation2 + $0x1c0] sm:$0xff]
        %v652 = vld [vmem:[#allocation2 + $0x1c8] sm:$0xff]
        %v653 = vld [vmem:[#allocation2 + $0x1d0] sm:$0xff]
        %v654 = vld [vmem:[#allocation2 + $0x1d8] sm:$0xff]
        %v655 = vld [vmem:[#allocation2 + $0x1e0] sm:$0xff]
        %v656 = vld [vmem:[#allocation2 + $0x1e8] sm:$0xff]
        %v657 = vld [vmem:[#allocation2 + $0x1f0] sm:$0xff]
        %v658 = vld [vmem:[#allocation2 + $0x1f8] sm:$0xff]
        %v659 = vld [vmem:[%s4] sm:$0x3]
        %v661 = vperm.slane %v659, 0
        %v662 = vperm.slane %v659, 1
        %v729 = vunpack.c.l.b16 %v595
        %v730 = vunpack.c.h.b16 %v595
        %v731 = vunpack.c.l.b16 %v596
        %v732 = vunpack.c.h.b16 %v596
        %v733 = vunpack.c.l.b16 %v597
        %v734 = vunpack.c.h.b16 %v597
        %v735 = vunpack.c.l.b16 %v598
        %v736 = vunpack.c.h.b16 %v598
        %v737 = vunpack.c.l.b16 %v599
        %v738 = vunpack.c.h.b16 %v599
        %v739 = vunpack.c.l.b16 %v600
        %v740 = vunpack.c.h.b16 %v600
        %v741 = vunpack.c.l.b16 %v601
        %v742 = vunpack.c.h.b16 %v601
        %v743 = vunpack.c.l.b16 %v602
        %v744 = vunpack.c.h.b16 %v602
        %v745 = vunpack.c.l.b16 %v603
        %v746 = vunpack.c.h.b16 %v603
        %v747 = vunpack.c.l.b16 %v604
        %v748 = vunpack.c.h.b16 %v604
        %v749 = vunpack.c.l.b16 %v605
        %v750 = vunpack.c.h.b16 %v605
        %v751 = vunpack.c.l.b16 %v606
        %v752 = vunpack.c.h.b16 %v606
        %v753 = vunpack.c.l.b16 %v607
        %v754 = vunpack.c.h.b16 %v607
        %v755 = vunpack.c.l.b16 %v608
        %v756 = vunpack.c.h.b16 %v608
        %v757 = vunpack.c.l.b16 %v609
        %v758 = vunpack.c.h.b16 %v609
        %v759 = vunpack.c.l.b16 %v610
        %v760 = vunpack.c.h.b16 %v610
        %v761 = vunpack.c.l.b16 %v611
        %v762 = vunpack.c.h.b16 %v611
        %v763 = vunpack.c.l.b16 %v612
        %v764 = vunpack.c.h.b16 %v612
        %v765 = vunpack.c.l.b16 %v613
        %v766 = vunpack.c.h.b16 %v613
        %v767 = vunpack.c.l.b16 %v614
        %v768 = vunpack.c.h.b16 %v614
        %v769 = vunpack.c.l.b16 %v615
        %v770 = vunpack.c.h.b16 %v615
        %v771 = vunpack.c.l.b16 %v616
        %v772 = vunpack.c.h.b16 %v616
        %v773 = vunpack.c.l.b16 %v617
        %v774 = vunpack.c.h.b16 %v617
        %v775 = vunpack.c.l.b16 %v618
        %v776 = vunpack.c.h.b16 %v618
        %v777 = vunpack.c.l.b16 %v619
        %v778 = vunpack.c.h.b16 %v619
        %v779 = vunpack.c.l.b16 %v620
        %v780 = vunpack.c.h.b16 %v620
        %v781 = vunpack.c.l.b16 %v621
        %v782 = vunpack.c.h.b16 %v621
        %v783 = vunpack.c.l.b16 %v622
        %v784 = vunpack.c.h.b16 %v622
        %v785 = vunpack.c.l.b16 %v623
        %v786 = vunpack.c.h.b16 %v623
        %v787 = vunpack.c.l.b16 %v624
        %v788 = vunpack.c.h.b16 %v624
        %v789 = vunpack.c.l.b16 %v625
        %v790 = vunpack.c.h.b16 %v625
        %v791 = vunpack.c.l.b16 %v626
        %v792 = vunpack.c.h.b16 %v626
        %v793 = vunpack.c.l.b16 %v627
        %v794 = vunpack.c.h.b16 %v627
        %v795 = vunpack.c.l.b16 %v628
        %v796 = vunpack.c.h.b16 %v628
        %v797 = vunpack.c.l.b16 %v629
        %v798 = vunpack.c.h.b16 %v629
        %v799 = vunpack.c.l.b16 %v630
        %v800 = vunpack.c.h.b16 %v630
        %v801 = vunpack.c.l.b16 %v631
        %v802 = vunpack.c.h.b16 %v631
        %v803 = vunpack.c.l.b16 %v632
        %v804 = vunpack.c.h.b16 %v632
        %v805 = vunpack.c.l.b16 %v633
        %v806 = vunpack.c.h.b16 %v633
        %v807 = vunpack.c.l.b16 %v634
        %v808 = vunpack.c.h.b16 %v634
        %v809 = vunpack.c.l.b16 %v635
        %v810 = vunpack.c.h.b16 %v635
        %v811 = vunpack.c.l.b16 %v636
        %v812 = vunpack.c.h.b16 %v636
        %v813 = vunpack.c.l.b16 %v637
        %v814 = vunpack.c.h.b16 %v637
        %v815 = vunpack.c.l.b16 %v638
        %v816 = vunpack.c.h.b16 %v638
        %v817 = vunpack.c.l.b16 %v639
        %v818 = vunpack.c.h.b16 %v639
        %v819 = vunpack.c.l.b16 %v640
        %v820 = vunpack.c.h.b16 %v640
        %v821 = vunpack.c.l.b16 %v641
        %v822 = vunpack.c.h.b16 %v641
        %v823 = vunpack.c.l.b16 %v642
        %v824 = vunpack.c.h.b16 %v642
        %v825 = vunpack.c.l.b16 %v643
        %v826 = vunpack.c.h.b16 %v643
        %v827 = vunpack.c.l.b16 %v644
        %v828 = vunpack.c.h.b16 %v644
        %v829 = vunpack.c.l.b16 %v645
        %v830 = vunpack.c.h.b16 %v645
        %v831 = vunpack.c.l.b16 %v646
        %v832 = vunpack.c.h.b16 %v646
        %v833 = vunpack.c.l.b16 %v647
        %v834 = vunpack.c.h.b16 %v647
        %v835 = vunpack.c.l.b16 %v648
        %v836 = vunpack.c.h.b16 %v648
        %v837 = vunpack.c.l.b16 %v649
        %v838 = vunpack.c.h.b16 %v649
        %v839 = vunpack.c.l.b16 %v650
        %v840 = vunpack.c.h.b16 %v650
        %v841 = vunpack.c.l.b16 %v651
        %v842 = vunpack.c.h.b16 %v651
        %v843 = vunpack.c.l.b16 %v652
        %v844 = vunpack.c.h.b16 %v652
        %v845 = vunpack.c.l.b16 %v653
        %v846 = vunpack.c.h.b16 %v653
        %v847 = vunpack.c.l.b16 %v654
        %v848 = vunpack.c.h.b16 %v654
        %v849 = vunpack.c.l.b16 %v655
        %v850 = vunpack.c.h.b16 %v655
        %v851 = vunpack.c.l.b16 %v656
        %v852 = vunpack.c.h.b16 %v656
        %v853 = vunpack.c.l.b16 %v657
        %v854 = vunpack.c.h.b16 %v657
        %v855 = vunpack.c.l.b16 %v658
        %v856 = vunpack.c.h.b16 %v658
        %v857 = vpack.c.b16 %v731, %v729
        %v858 = vpack.c.b16 %v732, %v730
        %v859 = vpack.c.b16 %v735, %v733
        %v860 = vpack.c.b16 %v736, %v734
        %v861 = vpack.c.b16 %v739, %v737
        %v862 = vpack.c.b16 %v740, %v738
        %v863 = vpack.c.b16 %v743, %v741
        %v864 = vpack.c.b16 %v744, %v742
        %v865 = vpack.c.b16 %v747, %v745
        %v866 = vpack.c.b16 %v748, %v746
        %v867 = vpack.c.b16 %v751, %v749
        %v868 = vpack.c.b16 %v752, %v750
        %v869 = vpack.c.b16 %v755, %v753
        %v870 = vpack.c.b16 %v756, %v754
        %v871 = vpack.c.b16 %v759, %v757
        %v872 = vpack.c.b16 %v760, %v758
        %v873 = vpack.c.b16 %v763, %v761
        %v874 = vpack.c.b16 %v764, %v762
        %v875 = vpack.c.b16 %v767, %v765
        %v876 = vpack.c.b16 %v768, %v766
        %v877 = vpack.c.b16 %v771, %v769
        %v878 = vpack.c.b16 %v772, %v770
        %v879 = vpack.c.b16 %v775, %v773
        %v880 = vpack.c.b16 %v776, %v774
        %v881 = vpack.c.b16 %v779, %v777
        %v882 = vpack.c.b16 %v780, %v778
        %v883 = vpack.c.b16 %v783, %v781
        %v884 = vpack.c.b16 %v784, %v782
        %v885 = vpack.c.b16 %v787, %v785
        %v886 = vpack.c.b16 %v788, %v786
        %v887 = vpack.c.b16 %v791, %v789
        %v888 = vpack.c.b16 %v792, %v790
        %v889 = vpack.c.b16 %v795, %v793
        %v890 = vpack.c.b16 %v796, %v794
        %v891 = vpack.c.b16 %v799, %v797
        %v892 = vpack.c.b16 %v800, %v798
        %v893 = vpack.c.b16 %v803, %v801
        %v894 = vpack.c.b16 %v804, %v802
        %v895 = vpack.c.b16 %v807, %v805
        %v896 = vpack.c.b16 %v808, %v806
        %v897 = vpack.c.b16 %v811, %v809
        %v898 = vpack.c.b16 %v812, %v810
        %v899 = vpack.c.b16 %v815, %v813
        %v900 = vpack.c.b16 %v816, %v814
        %v901 = vpack.c.b16 %v819, %v817
        %v902 = vpack.c.b16 %v820, %v818
        %v903 = vpack.c.b16 %v823, %v821
        %v904 = vpack.c.b16 %v824, %v822
        %v905 = vpack.c.b16 %v827, %v825
        %v906 = vpack.c.b16 %v828, %v826
        %v907 = vpack.c.b16 %v831, %v829
        %v908 = vpack.c.b16 %v832, %v830
        %v909 = vpack.c.b16 %v835, %v833
        %v910 = vpack.c.b16 %v836, %v834
        %v911 = vpack.c.b16 %v839, %v837
        %v912 = vpack.c.b16 %v840, %v838
        %v913 = vpack.c.b16 %v843, %v841
        %v914 = vpack.c.b16 %v844, %v842
        %v915 = vpack.c.b16 %v847, %v845
        %v916 = vpack.c.b16 %v848, %v846
        %v917 = vpack.c.b16 %v851, %v849
        %v918 = vpack.c.b16 %v852, %v850
        %v919 = vpack.c.b16 %v855, %v853
        %v920 = vpack.c.b16 %v856, %v854
        %985 = vmatpush.bf16.msra.mxu0 %v871
        %986 = vmatpush.bf16.msra.mxu0 %v869
        %987 = vmatpush.bf16.msra.mxu0 %v867
        %988 = vmatpush.bf16.msra.mxu0 %v865
        %989 = vmatpush.bf16.msra.mxu0 %v863
        %990 = vmatpush.bf16.msra.mxu0 %v861
        %991 = vmatpush.bf16.msra.mxu0 %v859
        %992 = vmatpush.bf16.msra.mxu0 %v857
        %993 = vmatmul.bf16.gmra.mxu0 %v579
        %v994 = vpop.f32.mrf.mxu0
        %v995 = vadd.f32 %v661, %v994
        %v996 = vpop.f32.mrf.mxu0
        %v997 = vadd.f32 %v661, %v996
        %998 = vmatmul.bf16.gmra.mxu0 %v583
        %v999 = vpop.f32.mrf.mxu0
        %v1000 = vadd.f32 %v661, %v999
        %v1001 = vpop.f32.mrf.mxu0
        %v1002 = vadd.f32 %v661, %v1001
        %1003 = vmatmul.bf16.gmra.mxu0 %v587
        %v1004 = vpop.f32.mrf.mxu0
        %v1005 = vadd.f32 %v661, %v1004
        %v1006 = vpop.f32.mrf.mxu0
        %v1007 = vadd.f32 %v661, %v1006
        %1008 = vmatmul.bf16.gmra.mxu0 %v591
        %v1009 = vpop.f32.mrf.mxu0
        %v1010 = vadd.f32 %v661, %v1009
        %v1011 = vpop.f32.mrf.mxu0
        %v1012 = vadd.f32 %v661, %v1011
        %1013 = vdwg.mxu0
        %1014 = vmatpush.bf16.msra.mxu0 %v887
        %1015 = vmatpush.bf16.msra.mxu0 %v885
        %1016 = vmatpush.bf16.msra.mxu0 %v883
        %1017 = vmatpush.bf16.msra.mxu0 %v881
        %1018 = vmatpush.bf16.msra.mxu0 %v879
        %1019 = vmatpush.bf16.msra.mxu0 %v877
        %1020 = vmatpush.bf16.msra.mxu0 %v875
        %1021 = vmatpush.bf16.msra.mxu0 %v873
        %1022 = vmatmul.bf16.gmra.mxu0 %v580
        %v1023 = vpop.f32.mrf.mxu0
        %v1024 = vadd.f32 %v995, %v1023
        %v1025 = vpop.f32.mrf.mxu0
        %v1026 = vadd.f32 %v997, %v1025
        %1027 = vmatmul.bf16.gmra.mxu0 %v584
        %v1028 = vpop.f32.mrf.mxu0
        %v1029 = vadd.f32 %v1000, %v1028
        %v1030 = vpop.f32.mrf.mxu0
        %v1031 = vadd.f32 %v1002, %v1030
        %1032 = vmatmul.bf16.gmra.mxu0 %v588
        %v1033 = vpop.f32.mrf.mxu0
        %v1034 = vadd.f32 %v1005, %v1033
        %v1035 = vpop.f32.mrf.mxu0
        %v1036 = vadd.f32 %v1007, %v1035
        %1037 = vmatmul.bf16.gmra.mxu0 %v592
        %v1038 = vpop.f32.mrf.mxu0
        %v1039 = vadd.f32 %v1010, %v1038
        %v1040 = vpop.f32.mrf.mxu0
        %v1041 = vadd.f32 %v1012, %v1040
        %1042 = vdwg.mxu0
        %1043 = vmatpush.bf16.msra.mxu0 %v903
        %1044 = vmatpush.bf16.msra.mxu0 %v901
        %1045 = vmatpush.bf16.msra.mxu0 %v899
        %1046 = vmatpush.bf16.msra.mxu0 %v897
        %1047 = vmatpush.bf16.msra.mxu0 %v895
        %1048 = vmatpush.bf16.msra.mxu0 %v893
        %1049 = vmatpush.bf16.msra.mxu0 %v891
        %1050 = vmatpush.bf16.msra.mxu0 %v889
        %1051 = vmatmul.bf16.gmra.mxu0 %v581
        %v1052 = vpop.f32.mrf.mxu0
        %v1053 = vadd.f32 %v1024, %v1052
        %v1054 = vpop.f32.mrf.mxu0
        %v1055 = vadd.f32 %v1026, %v1054
        %1056 = vmatmul.bf16.gmra.mxu0 %v585
        %v1057 = vpop.f32.mrf.mxu0
        %v1058 = vadd.f32 %v1029, %v1057
        %v1059 = vpop.f32.mrf.mxu0
        %v1060 = vadd.f32 %v1031, %v1059
        %1061 = vmatmul.bf16.gmra.mxu0 %v589
        %v1062 = vpop.f32.mrf.mxu0
        %v1063 = vadd.f32 %v1034, %v1062
        %v1064 = vpop.f32.mrf.mxu0
        %v1065 = vadd.f32 %v1036, %v1064
        %1066 = vmatmul.bf16.gmra.mxu0 %v593
        %v1067 = vpop.f32.mrf.mxu0
        %v1068 = vadd.f32 %v1039, %v1067
        %v1069 = vpop.f32.mrf.mxu0
        %v1070 = vadd.f32 %v1041, %v1069
        %1071 = vdwg.mxu0
        %1072 = vmatpush.bf16.msra.mxu0 %v919
        %1073 = vmatpush.bf16.msra.mxu0 %v917
        %1074 = vmatpush.bf16.msra.mxu0 %v915
        %1075 = vmatpush.bf16.msra.mxu0 %v913
        %1076 = vmatpush.bf16.msra.mxu0 %v911
        %1077 = vmatpush.bf16.msra.mxu0 %v909
        %1078 = vmatpush.bf16.msra.mxu0 %v907
        %1079 = vmatpush.bf16.msra.mxu0 %v905
        %1080 = vmatmul.bf16.gmra.mxu0 %v582
        %v1081 = vpop.f32.mrf.mxu0
        %v1082 = vadd.f32 %v1053, %v1081
        %v1083 = vpop.f32.mrf.mxu0
        %v1084 = vadd.f32 %v1055, %v1083
        %1085 = vmatmul.bf16.gmra.mxu0 %v586
        %v1086 = vpop.f32.mrf.mxu0
        %v1087 = vadd.f32 %v1058, %v1086
        %v1088 = vpop.f32.mrf.mxu0
        %v1089 = vadd.f32 %v1060, %v1088
        %1090 = vmatmul.bf16.gmra.mxu0 %v590
        %v1091 = vpop.f32.mrf.mxu0
        %v1092 = vadd.f32 %v1063, %v1091
        %v1093 = vpop.f32.mrf.mxu0
        %v1094 = vadd.f32 %v1065, %v1093
        %1095 = vmatmul.bf16.gmra.mxu0 %v594
        %v1096 = vpop.f32.mrf.mxu0
        %v1097 = vadd.f32 %v1068, %v1096
        %v1098 = vpop.f32.mrf.mxu0
        %v1099 = vadd.f32 %v1070, %v1098
        %1100 = vdwg.mxu0
        %1101 = vmatpush.bf16.msra.mxu0 %v872
        %1102 = vmatpush.bf16.msra.mxu0 %v870
        %1103 = vmatpush.bf16.msra.mxu0 %v868
        %1104 = vmatpush.bf16.msra.mxu0 %v866
        %1105 = vmatpush.bf16.msra.mxu0 %v864
        %1106 = vmatpush.bf16.msra.mxu0 %v862
        %1107 = vmatpush.bf16.msra.mxu0 %v860
        %1108 = vmatpush.bf16.msra.mxu0 %v858
        %1109 = vmatmul.bf16.gmra.mxu0 %v579
        %v1110 = vpop.f32.mrf.mxu0
        %v1111 = vadd.f32 %v662, %v1110
        %v1112 = vpop.f32.mrf.mxu0
        %v1113 = vadd.f32 %v662, %v1112
        %1114 = vmatmul.bf16.gmra.mxu0 %v583
        %v1115 = vpop.f32.mrf.mxu0
        %v1116 = vadd.f32 %v662, %v1115
        %v1117 = vpop.f32.mrf.mxu0
        %v1118 = vadd.f32 %v662, %v1117
        %1119 = vmatmul.bf16.gmra.mxu0 %v587
        %v1120 = vpop.f32.mrf.mxu0
        %v1121 = vadd.f32 %v662, %v1120
        %v1122 = vpop.f32.mrf.mxu0
        %v1123 = vadd.f32 %v662, %v1122
        %1124 = vmatmul.bf16.gmra.mxu0 %v591
        %v1125 = vpop.f32.mrf.mxu0
        %v1126 = vadd.f32 %v662, %v1125
        %v1127 = vpop.f32.mrf.mxu0
        %v1128 = vadd.f32 %v662, %v1127
        %1129 = vdwg.mxu0
        %1130 = vmatpush.bf16.msra.mxu0 %v888
        %1131 = vmatpush.bf16.msra.mxu0 %v886
        %1132 = vmatpush.bf16.msra.mxu0 %v884
        %1133 = vmatpush.bf16.msra.mxu0 %v882
        %1134 = vmatpush.bf16.msra.mxu0 %v880
        %1135 = vmatpush.bf16.msra.mxu0 %v878
        %1136 = vmatpush.bf16.msra.mxu0 %v876
        %1137 = vmatpush.bf16.msra.mxu0 %v874
        %1138 = vmatmul.bf16.gmra.mxu0 %v580
        %v1139 = vpop.f32.mrf.mxu0
        %v1140 = vadd.f32 %v1111, %v1139
        %v1141 = vpop.f32.mrf.mxu0
        %v1142 = vadd.f32 %v1113, %v1141
        %1143 = vmatmul.bf16.gmra.mxu0 %v584
        %v1144 = vpop.f32.mrf.mxu0
        %v1145 = vadd.f32 %v1116, %v1144
        %v1146 = vpop.f32.mrf.mxu0
        %v1147 = vadd.f32 %v1118, %v1146
        %1148 = vmatmul.bf16.gmra.mxu0 %v588
        %v1149 = vpop.f32.mrf.mxu0
        %v1150 = vadd.f32 %v1121, %v1149
        %v1151 = vpop.f32.mrf.mxu0
        %v1152 = vadd.f32 %v1123, %v1151
        %1153 = vmatmul.bf16.gmra.mxu0 %v592
        %v1154 = vpop.f32.mrf.mxu0
        %v1155 = vadd.f32 %v1126, %v1154
        %v1156 = vpop.f32.mrf.mxu0
        %v1157 = vadd.f32 %v1128, %v1156
        %1158 = vdwg.mxu0
        %1159 = vmatpush.bf16.msra.mxu0 %v904
        %1160 = vmatpush.bf16.msra.mxu0 %v902
        %1161 = vmatpush.bf16.msra.mxu0 %v900
        %1162 = vmatpush.bf16.msra.mxu0 %v898
        %1163 = vmatpush.bf16.msra.mxu0 %v896
        %1164 = vmatpush.bf16.msra.mxu0 %v894
        %1165 = vmatpush.bf16.msra.mxu0 %v892
        %1166 = vmatpush.bf16.msra.mxu0 %v890
        %1167 = vmatmul.bf16.gmra.mxu0 %v581
        %v1168 = vpop.f32.mrf.mxu0
        %v1169 = vadd.f32 %v1140, %v1168
        %v1170 = vpop.f32.mrf.mxu0
        %v1171 = vadd.f32 %v1142, %v1170
        %1172 = vmatmul.bf16.gmra.mxu0 %v585
        %v1173 = vpop.f32.mrf.mxu0
        %v1174 = vadd.f32 %v1145, %v1173
        %v1175 = vpop.f32.mrf.mxu0
        %v1176 = vadd.f32 %v1147, %v1175
        %1177 = vmatmul.bf16.gmra.mxu0 %v589
        %v1178 = vpop.f32.mrf.mxu0
        %v1179 = vadd.f32 %v1150, %v1178
        %v1180 = vpop.f32.mrf.mxu0
        %v1181 = vadd.f32 %v1152, %v1180
        %1182 = vmatmul.bf16.gmra.mxu0 %v593
        %v1183 = vpop.f32.mrf.mxu0
        %v1184 = vadd.f32 %v1155, %v1183
        %v1185 = vpop.f32.mrf.mxu0
        %v1186 = vadd.f32 %v1157, %v1185
        %1187 = vdwg.mxu0
        %1188 = vmatpush.bf16.msra.mxu0 %v920
        %1189 = vmatpush.bf16.msra.mxu0 %v918
        %1190 = vmatpush.bf16.msra.mxu0 %v916
        %1191 = vmatpush.bf16.msra.mxu0 %v914
        %1192 = vmatpush.bf16.msra.mxu0 %v912
        %1193 = vmatpush.bf16.msra.mxu0 %v910
        %1194 = vmatpush.bf16.msra.mxu0 %v908
        %1195 = vmatpush.bf16.msra.mxu0 %v906
        %1196 = vmatmul.bf16.gmra.mxu0 %v582
        %v1197 = vpop.f32.mrf.mxu0
        %v1198 = vadd.f32 %v1169, %v1197
        %v1199 = vpop.f32.mrf.mxu0
        %v1200 = vadd.f32 %v1171, %v1199
        %1201 = vmatmul.bf16.gmra.mxu0 %v586
        %v1202 = vpop.f32.mrf.mxu0
        %v1203 = vadd.f32 %v1174, %v1202
        %v1204 = vpop.f32.mrf.mxu0
        %v1205 = vadd.f32 %v1176, %v1204
        %1206 = vmatmul.bf16.gmra.mxu0 %v590
        %v1207 = vpop.f32.mrf.mxu0
        %v1208 = vadd.f32 %v1179, %v1207
        %v1209 = vpop.f32.mrf.mxu0
        %v1210 = vadd.f32 %v1181, %v1209
        %1211 = vmatmul.bf16.gmra.mxu0 %v594
        %v1212 = vpop.f32.mrf.mxu0
        %v1213 = vadd.f32 %v1184, %v1212
        %v1214 = vpop.f32.mrf.mxu0
        %v1215 = vadd.f32 %v1186, %v1214
        %1216 = vdwg.mxu0
        %v1217 = vmax.f32 %v1082, 0.0
        %v1218 = vmax.f32 %v1198, 0.0
        %v1219 = vmax.f32 %v1084, 0.0
        %v1220 = vmax.f32 %v1200, 0.0
        %v1221 = vmax.f32 %v1087, 0.0
        %v1222 = vmax.f32 %v1203, 0.0
        %v1223 = vmax.f32 %v1089, 0.0
        %v1224 = vmax.f32 %v1205, 0.0
        %v1225 = vmax.f32 %v1092, 0.0
        %v1226 = vmax.f32 %v1208, 0.0
        %v1227 = vmax.f32 %v1094, 0.0
        %v1228 = vmax.f32 %v1210, 0.0
        %v1229 = vmax.f32 %v1097, 0.0
        %v1230 = vmax.f32 %v1213, 0.0
        %v1231 = vmax.f32 %v1099, 0.0
        %v1232 = vmax.f32 %v1215, 0.0
        %v1233 = vpack.c.bf16 %v1219, %v1217
        %v1234 = vpack.c.bf16 %v1220, %v1218
        %v1235 = vpack.c.bf16 %v1223, %v1221
        %v1236 = vpack.c.bf16 %v1224, %v1222
        %v1237 = vpack.c.bf16 %v1227, %v1225
        %v1238 = vpack.c.bf16 %v1228, %v1226
        %v1239 = vpack.c.bf16 %v1231, %v1229
        %v1240 = vpack.c.bf16 %v1232, %v1230
        %v1241 = vld [vmem:[%s5] sm:$0xf]
        %v1242 = vld [vmem:[%s5 + $0x4] sm:$0xf]
        %v1243 = vld [vmem:[%s5 + $0x8] sm:$0xf]
        %v1244 = vld [vmem:[%s5 + $0xc] sm:$0xf]
        %v1245 = vld [vmem:[%s5 + $0x10] sm:$0xf]
        %v1246 = vld [vmem:[%s5 + $0x14] sm:$0xf]
        %v1247 = vld [vmem:[%s5 + $0x18] sm:$0xf]
        %v1248 = vld [vmem:[%s5 + $0x1c] sm:$0xf]
        %v1249 = vld [vmem:[%s5 + $0x20] sm:$0xf]
        %v1250 = vld [vmem:[%s5 + $0x24] sm:$0xf]
        %v1251 = vld [vmem:[%s5 + $0x28] sm:$0xf]
        %v1252 = vld [vmem:[%s5 + $0x2c] sm:$0xf]
        %v1253 = vld [vmem:[%s5 + $0x30] sm:$0xf]
        %v1254 = vld [vmem:[%s5 + $0x34] sm:$0xf]
        %v1255 = vld [vmem:[%s5 + $0x38] sm:$0xf]
        %v1256 = vld [vmem:[%s5 + $0x3c] sm:$0xf]
        %v1257 = vld [vmem:[%s5 + $0x40] sm:$0xf]
        %v1258 = vld [vmem:[%s5 + $0x44] sm:$0xf]
        %v1259 = vld [vmem:[%s5 + $0x48] sm:$0xf]
        %v1260 = vld [vmem:[%s5 + $0x4c] sm:$0xf]
        %v1261 = vld [vmem:[%s5 + $0x50] sm:$0xf]
        %v1262 = vld [vmem:[%s5 + $0x54] sm:$0xf]
        %v1263 = vld [vmem:[%s5 + $0x58] sm:$0xf]
        %v1264 = vld [vmem:[%s5 + $0x5c] sm:$0xf]
        %v1265 = vld [vmem:[%s5 + $0x60] sm:$0xf]
        %v1266 = vld [vmem:[%s5 + $0x64] sm:$0xf]
        %v1267 = vld [vmem:[%s5 + $0x68] sm:$0xf]
        %v1268 = vld [vmem:[%s5 + $0x6c] sm:$0xf]
        %v1269 = vld [vmem:[%s5 + $0x70] sm:$0xf]
        %v1270 = vld [vmem:[%s5 + $0x74] sm:$0xf]
        %v1271 = vld [vmem:[%s5 + $0x78] sm:$0xf]
        %v1272 = vld [vmem:[%s5 + $0x7c] sm:$0xf]
        %v1273 = vld [vmem:[%s6] sm:$0x1]
        %v1275 = vperm.slane %v1273, 0
        %v1309 = vunpack.c.l.b16 %v1241
        %v1310 = vunpack.c.l.b16 %v1242
        %v1311 = vunpack.c.l.b16 %v1243
        %v1312 = vunpack.c.l.b16 %v1244
        %v1313 = vunpack.c.l.b16 %v1245
        %v1314 = vunpack.c.l.b16 %v1246
        %v1315 = vunpack.c.l.b16 %v1247
        %v1316 = vunpack.c.l.b16 %v1248
        %v1317 = vunpack.c.l.b16 %v1249
        %v1318 = vunpack.c.l.b16 %v1250
        %v1319 = vunpack.c.l.b16 %v1251
        %v1320 = vunpack.c.l.b16 %v1252
        %v1321 = vunpack.c.l.b16 %v1253
        %v1322 = vunpack.c.l.b16 %v1254
        %v1323 = vunpack.c.l.b16 %v1255
        %v1324 = vunpack.c.l.b16 %v1256
        %v1325 = vunpack.c.l.b16 %v1257
        %v1326 = vunpack.c.l.b16 %v1258
        %v1327 = vunpack.c.l.b16 %v1259
        %v1328 = vunpack.c.l.b16 %v1260
        %v1329 = vunpack.c.l.b16 %v1261
        %v1330 = vunpack.c.l.b16 %v1262
        %v1331 = vunpack.c.l.b16 %v1263
        %v1332 = vunpack.c.l.b16 %v1264
        %v1333 = vunpack.c.l.b16 %v1265
        %v1334 = vunpack.c.l.b16 %v1266
        %v1335 = vunpack.c.l.b16 %v1267
        %v1336 = vunpack.c.l.b16 %v1268
        %v1337 = vunpack.c.l.b16 %v1269
        %v1338 = vunpack.c.l.b16 %v1270
        %v1339 = vunpack.c.l.b16 %v1271
        %v1340 = vunpack.c.l.b16 %v1272
        %v1341 = vpack.c.b16 %v1310, %v1309
        %v1342 = vpack.c.b16 %v1312, %v1311
        %v1343 = vpack.c.b16 %v1314, %v1313
        %v1344 = vpack.c.b16 %v1316, %v1315
        %v1345 = vpack.c.b16 %v1318, %v1317
        %v1346 = vpack.c.b16 %v1320, %v1319
        %v1347 = vpack.c.b16 %v1322, %v1321
        %v1348 = vpack.c.b16 %v1324, %v1323
        %v1349 = vpack.c.b16 %v1326, %v1325
        %v1350 = vpack.c.b16 %v1328, %v1327
        %v1351 = vpack.c.b16 %v1330, %v1329
        %v1352 = vpack.c.b16 %v1332, %v1331
        %v1353 = vpack.c.b16 %v1334, %v1333
        %v1354 = vpack.c.b16 %v1336, %v1335
        %v1355 = vpack.c.b16 %v1338, %v1337
        %v1356 = vpack.c.b16 %v1340, %v1339
        %1373 = vmatpush.bf16.msra.mxu0 %v1348
        %1374 = vmatpush.bf16.msra.mxu0 %v1347
        %1375 = vmatpush.bf16.msra.mxu0 %v1346
        %1376 = vmatpush.bf16.msra.mxu0 %v1345
        %1377 = vmatpush.bf16.msra.mxu0 %v1344
        %1378 = vmatpush.bf16.msra.mxu0 %v1343
        %1379 = vmatpush.bf16.msra.mxu0 %v1342
        %1380 = vmatpush.bf16.msra.mxu0 %v1341
        %1381 = vmatmul.bf16.gmra.mxu0 %v1233
        %v1382 = vpop.f32.mrf.mxu0
        %v1383 = vadd.f32 %v1275, %v1382
        %v1384 = vpop.f32.mrf.mxu0
        %v1385 = vadd.f32 %v1275, %v1384
        %1386 = vmatmul.bf16.gmra.mxu0 %v1235
        %v1387 = vpop.f32.mrf.mxu0
        %v1388 = vadd.f32 %v1275, %v1387
        %v1389 = vpop.f32.mrf.mxu0
        %v1390 = vadd.f32 %v1275, %v1389
        %1391 = vmatmul.bf16.gmra.mxu0 %v1237
        %v1392 = vpop.f32.mrf.mxu0
        %v1393 = vadd.f32 %v1275, %v1392
        %v1394 = vpop.f32.mrf.mxu0
        %v1395 = vadd.f32 %v1275, %v1394
        %1396 = vmatmul.bf16.gmra.mxu0 %v1239
        %v1397 = vpop.f32.mrf.mxu0
        %v1398 = vadd.f32 %v1275, %v1397
        %v1399 = vpop.f32.mrf.mxu0
        %v1400 = vadd.f32 %v1275, %v1399
        %1401 = vdwg.mxu0
        %1402 = vmatpush.bf16.msra.mxu0 %v1356
        %1403 = vmatpush.bf16.msra.mxu0 %v1355
        %1404 = vmatpush.bf16.msra.mxu0 %v1354
        %1405 = vmatpush.bf16.msra.mxu0 %v1353
        %1406 = vmatpush.bf16.msra.mxu0 %v1352
        %1407 = vmatpush.bf16.msra.mxu0 %v1351
        %1408 = vmatpush.bf16.msra.mxu0 %v1350
        %1409 = vmatpush.bf16.msra.mxu0 %v1349
        %1410 = vmatmul.bf16.gmra.mxu0 %v1234
        %v1411 = vpop.f32.mrf.mxu0
        %v1412 = vadd.f32 %v1383, %v1411
        %v1413 = vpop.f32.mrf.mxu0
        %v1414 = vadd.f32 %v1385, %v1413
        %1415 = vmatmul.bf16.gmra.mxu0 %v1236
        %v1416 = vpop.f32.mrf.mxu0
        %v1417 = vadd.f32 %v1388, %v1416
        %v1418 = vpop.f32.mrf.mxu0
        %v1419 = vadd.f32 %v1390, %v1418
        %1420 = vmatmul.bf16.gmra.mxu0 %v1238
        %v1421 = vpop.f32.mrf.mxu0
        %v1422 = vadd.f32 %v1393, %v1421
        %v1423 = vpop.f32.mrf.mxu0
        %v1424 = vadd.f32 %v1395, %v1423
        %1425 = vmatmul.bf16.gmra.mxu0 %v1240
        %v1426 = vpop.f32.mrf.mxu0
        %v1427 = vadd.f32 %v1398, %v1426
        %v1428 = vpop.f32.mrf.mxu0
        %v1429 = vadd.f32 %v1400, %v1428
        %1430 = vdwg.mxu0
        %vm1431 = vcmask 261120
        %1432 = vst.msk [vmem:[%s297] sm:$0xff] %vm1431, %v1412
        %1433 = vst.msk [vmem:[%s297 + $0x8] sm:$0xff] %vm1431, %v1414
        %1434 = vst.msk [vmem:[%s297 + $0x10] sm:$0xff] %vm1431, %v1417
        %1435 = vst.msk [vmem:[%s297 + $0x18] sm:$0xff] %vm1431, %v1419
        %1436 = vst.msk [vmem:[%s297 + $0x20] sm:$0xff] %vm1431, %v1422
        %1437 = vst.msk [vmem:[%s297 + $0x28] sm:$0xff] %vm1431, %v1424
        %1438 = vst.msk [vmem:[%s297 + $0x30] sm:$0xff] %vm1431, %v1427
        %1439 = vst.msk [vmem:[%s297 + $0x38] sm:$0xff] %vm1431, %v1429
        %s1440 = smul.u32 8, %s19
        %p1441 = scmp.lt.s32.totalorder %s1440, 15
        %s1442 = scalar_select %p1441, %s1440, 15
        %s1443 = smul.addr %s1442, 8
        %s1444 = scalar_lea.vmem %s7, %s1443
        // Predicated region
        $region53: #{_predict_pallas.1} parent=47 // pred_check
          %p1445 = pneg %p189
        $region54: #{_predict_pallas.1} parent=47 // pred_check_branch
          %1447 = sbr.rel (%p1445) target = $region56
        $region55: #{_predict_pallas.1} parent=47 // pred_region
          %s1448 = smul.u32 8, %s19
        $region56: #{_predict_pallas.1} parent=47 // pred_fallthru
          _
      $region48: #{_predict_pallas.1} parent=5 // pred_fallthru
        _
      %p1449 = scmp.le.s32.totalorder 2, %s14
      // Predicated region
      $region57: #{_predict_pallas.1} parent=5 // pred_check
        %p1450 = pneg %p1449
      $region58: #{_predict_pallas.1} parent=5 // pred_check_branch
        %1452 = sbr.rel (%p1450) target = $region60
      $region59: #{_predict_pallas.1} parent=5 // pred_region
        %s1453 = ssub.s32 %s14, 2
        // Predicated region
        $region61: #{_predict_pallas.1} parent=59 // pred_check
          %p1454 = pneg %p195
        $region62: #{_predict_pallas.1} parent=59 // pred_check_branch
          %1456 = sbr.rel (%p1454) target = $region64
        $region63: #{_predict_pallas.1} parent=59 // pred_region
          %s1457 = smul.u32 8, %s20
          %p1458 = scmp.lt.s32.totalorder %s1457, 15
          %s1459 = scalar_select %p1458, %s1457, 15
          %s1460 = smul.addr %s1459, 8
          %s1461 = scalar_lea.vmem %s7, %s1460
        $region64: #{_predict_pallas.1} parent=59 // pred_fallthru
          _
      $region60: #{_predict_pallas.1} parent=5 // pred_fallthru
        _
    $region6: #{_predict_pallas.1} parent=1 // loop_footer
      %s18 = sadd.s32 1, %s14
    $region7: #{_predict_pallas.1} parent=1 // loop_footer_branch
      %13 = sbr.rel target = $region3
    $region8: #{_predict_pallas.1} parent=1 // loop_exit
      _
    %1462 = vsyncpa [#allocation3], 1
    %s1463 = scalar_lea.sflag [#allocation3], 1
    %1464 = vsyncpa %s1463, 1

</llo_original>
